<compile_context>
chip_gen: v6e
topology: v6e:2x2x1
jax: 0.10.0
libtpu: 0.0.40
codegen_flags: <defaults>
</compile_context>

<pallas_src>
import functools

import jax
import jax.numpy as jnp
from jax.experimental import pallas as pl
from jax.experimental.pallas import tpu as pltpu


_EPS = 1e-5


def _silu(x):
    # x * sigmoid(x) == 0.5 * x * (1 + tanh(0.5 * x)) -> a single EUP transcendental.
    return 0.5 * x * (1.0 + jnp.tanh(0.5 * x))


def _round_up(a, m):
    return ((a + m - 1) // m) * m


def mlp_kernel(
    x_ref,                      # (TB, F)   f32  (cast to bf16 in-kernel)
    w1_ref, b1_ref,             # (F, 128) bf16, (1, 128) f32   (eval BatchNorm pre-folded)
    w2_ref, b2_ref,             # (128, 64) bf16, (1, 64) f32
    ln_g_ref, ln_b_ref,         # (1, 64) f32
    w3_ref, b3_ref,             # (64, 128) bf16, (1, 128) f32  (class dim lane-padded)
    out_ref,                    # (TB, C)   f32  (store only the C real classes)
):
    # ----- Linear 1 (BatchNorm folded in): bf16 MXU, f32 accumulate -----
    x = x_ref[...].astype(jnp.bfloat16)
    h1 = jnp.dot(x, w1_ref[...], preferred_element_type=jnp.float32) + b1_ref[...]
    h1 = _silu(h1)                      # Dropout: identity in eval mode

    # ----- Linear 2 -----
    h2 = jnp.dot(h1.astype(jnp.bfloat16), w2_ref[...],
                 preferred_element_type=jnp.float32) + b2_ref[...]

    # ----- LayerNorm over last dim (64), single-pass stats -----
    n = h2.shape[-1]
    s1 = jnp.sum(h2, axis=-1, keepdims=True)
    s2 = jnp.sum(h2 * h2, axis=-1, keepdims=True)
    mu = s1 * (1.0 / n)
    var = jnp.maximum(s2 * (1.0 / n) - mu * mu, 0.0)        # biased variance (PyTorch LN)
    h2 = (h2 - mu) * jax.lax.rsqrt(var + _EPS) * ln_g_ref[...] + ln_b_ref[...]
    h2 = _silu(h2)                      # Dropout: identity in eval mode

    # ----- Linear 3: lane-dense (TB, 128) compute tile, narrow masked store of C cols -----
    out = jnp.dot(h2.astype(jnp.bfloat16), w3_ref[...],
                  preferred_element_type=jnp.float32) + b3_ref[...]
    out_ref[...] = out[:, : out_ref.shape[-1]].astype(out_ref.dtype)


def prepare_params(params):
    """One-time host-side prep (hoisted out of the per-call path):
    fold eval-mode BatchNorm1d into Linear1 (exact), cast matmul operands to bf16,
    and lane-pad the classifier weights/bias to 128 columns."""
    scale = params["bn_gamma"] * jax.lax.rsqrt(params["bn_var"] + _EPS)          # (1, H1)
    w1 = params["w1"] * scale                                                    # (F, H1)
    b1 = (params["b1"] - params["bn_mean"]) * scale + params["bn_beta"]          # (1, H1)

    C = params["w3"].shape[1]
    c_pad = _round_up(max(C, 128), 128)
    w3 = jnp.zeros((params["w3"].shape[0], c_pad), jnp.float32).at[:, :C].set(params["w3"])
    b3 = jnp.zeros((1, c_pad), jnp.float32).at[:, :C].set(params["b3"])

    folded = {
        "w1": w1.astype(jnp.bfloat16), "b1": b1,
        "w2": params["w2"].astype(jnp.bfloat16), "b2": params["b2"],
        "ln_gamma": params["ln_gamma"], "ln_beta": params["ln_beta"],
        "w3": w3.astype(jnp.bfloat16), "b3": b3,
    }
    return folded, C


@functools.partial(jax.jit, static_argnames=("num_classes", "block_batch"))
def multiclass_model_forward(x, folded, *, num_classes, block_batch=2048):
    """x: (B, input_size) float32.  folded: output of prepare_params.
    Returns logits (B, num_classes) float32, eval-mode semantics."""
    B, F = x.shape
    C = num_classes

    # ---- Batch tiling: multiples of 16 (bf16 sublane packing).  Keep >= 2 grid steps
    # when the batch allows so dimension_semantics=("parallel",) feeds both v7x TCs. ----
    b16 = _round_up(B, 16)
    tb = min(block_batch, b16)
    if tb >= b16 and b16 >= 32:
        tb = _round_up(b16 // 2, 16)
    b_pad = _round_up(B, tb)

    # Skip the padding copy entirely when the batch already tiles.
    x_p = x if b_pad == B else jnp.zeros((b_pad, F), x.dtype).at[:B, :].set(x)

    grid = (pl.cdiv(b_pad, tb),)

    def const(a):
        # Full-array block, constant index_map -> stays VMEM-resident across the grid.
        return pl.BlockSpec(a.shape, lambda i: (0,) * a.ndim)

    out = pl.pallas_call(
        mlp_kernel,
        out_shape=jax.ShapeDtypeStruct((b_pad, C), jnp.float32),
        grid=grid,
        in_specs=[
            pl.BlockSpec((tb, F), lambda i: (i, 0)),      # x: tiled along batch
            const(folded["w1"]), const(folded["b1"]),
            const(folded["w2"]), const(folded["b2"]),
            const(folded["ln_gamma"]), const(folded["ln_beta"]),
            const(folded["w3"]), const(folded["b3"]),
        ],
        out_specs=pl.BlockSpec((tb, C), lambda i: (i, 0)),
        compiler_params=pltpu.CompilerParams(dimension_semantics=("parallel",)),
    )(x_p, folded["w1"], folded["b1"], folded["w2"], folded["b2"],
      folded["ln_gamma"], folded["ln_beta"], folded["w3"], folded["b3"])

    return out[:B, :]


def init_params(key, input_size, num_classes):
    h1, h2 = 128, 64
    ks = jax.random.split(key, 6)
    params = {
        "w1": jax.random.normal(ks[0], (input_size, h1), jnp.float32) * 0.1,
        "b1": jax.random.normal(ks[1], (1, h1), jnp.float32) * 0.01,
        "bn_gamma": jnp.ones((1, h1), jnp.float32),
        "bn_beta": jnp.zeros((1, h1), jnp.float32),
        "bn_mean": jnp.zeros((1, h1), jnp.float32),   # running_mean init
        "bn_var": jnp.ones((1, h1), jnp.float32),     # running_var init
        "w2": jax.random.normal(ks[2], (h1, h2), jnp.float32) * 0.1,
        "b2": jax.random.normal(ks[3], (1, h2), jnp.float32) * 0.01,
        "ln_gamma": jnp.ones((1, h2), jnp.float32),
        "ln_beta": jnp.zeros((1, h2), jnp.float32),
        "w3": jax.random.normal(ks[4], (h2, num_classes), jnp.float32) * 0.1,
        "b3": jax.random.normal(ks[5], (1, num_classes), jnp.float32) * 0.01,
    }
    return params


if __name__ == "__main__":
    key = jax.random.PRNGKey(0)
    k_x, k_p = jax.random.split(key)

    batch = 8
    input_size = 32   # number of (standard-scaled) features
    num_classes = 4

    x = jax.random.normal(k_x, (batch, input_size), jnp.float32)
    params = init_params(k_p, input_size, num_classes)

    folded, C = prepare_params(params)   # one-time fold/cast/pad, reused across calls
    out = multiclass_model_forward(x, folded, num_classes=C)
    out = jax.block_until_ready(out)

    # Pure-JAX reference (same math, same bf16 matmul operands), sanity check only.
    def ref(x, p):
        eps = 1e-5
        scale = p["bn_gamma"] / jnp.sqrt(p["bn_var"] + eps)
        w1 = (p["w1"] * scale).astype(jnp.bfloat16)
        b1 = (p["b1"] - p["bn_mean"]) * scale + p["bn_beta"]
        h = jnp.dot(x.astype(jnp.bfloat16), w1, preferred_element_type=jnp.float32) + b1
        h = h * jax.nn.sigmoid(h)
        h = jnp.dot(h.astype(jnp.bfloat16), p["w2"].astype(jnp.bfloat16),
                    preferred_element_type=jnp.float32) + p["b2"]
        mu = h.mean(-1, keepdims=True)
        var = ((h - mu) ** 2).mean(-1, keepdims=True)
        h = (h - mu) / jnp.sqrt(var + eps) * p["ln_gamma"] + p["ln_beta"]
        h = h * jax.nn.sigmoid(h)
        return jnp.dot(h.astype(jnp.bfloat16), p["w3"].astype(jnp.bfloat16),
                       preferred_element_type=jnp.float32) + p["b3"]

    ref_out = ref(x, params)
    assert out.shape == (batch, num_classes)
    assert jnp.allclose(out, ref_out, atol=1e-2, rtol=1e-2), (
        float(jnp.max(jnp.abs(out - ref_out))))

    print("KERNEL_OK")
</pallas_src>

<mosaic_0001>
module attributes {stable_mosaic.version = 11 : i64} {
  func.func @mlp_kernel(%arg0: i32, %arg1: memref<16x32xf32, #tpu.memory_space<vmem>>, %arg2: memref<32x128xbf16, #tpu.memory_space<vmem>>, %arg3: memref<1x128xf32, #tpu.memory_space<vmem>>, %arg4: memref<128x64xbf16, #tpu.memory_space<vmem>>, %arg5: memref<1x64xf32, #tpu.memory_space<vmem>>, %arg6: memref<1x64xf32, #tpu.memory_space<vmem>>, %arg7: memref<1x64xf32, #tpu.memory_space<vmem>>, %arg8: memref<64x128xbf16, #tpu.memory_space<vmem>>, %arg9: memref<1x128xf32, #tpu.memory_space<vmem>>, %arg10: memref<16x4xf32, #tpu.memory_space<vmem>>) attributes {dimension_semantics = [#tpu.dimension_semantics<parallel>], iteration_bounds = array<i64: 1>, scalar_prefetch = 0 : i64, scratch_operands = 0 : i64, tpu.core_type = #tpu.core_type<tc>, window_params = [{transform_indices = @transform_0, window_bounds = array<i64: 16, 32>}, {pipeline_mode = #tpu.pipeline_mode<synchronous>, transform_indices = @transform_1, window_bounds = array<i64: 32, 128>}, {pipeline_mode = #tpu.pipeline_mode<synchronous>, transform_indices = @transform_2, window_bounds = array<i64: 1, 128>}, {pipeline_mode = #tpu.pipeline_mode<synchronous>, transform_indices = @transform_3, window_bounds = array<i64: 128, 64>}, {pipeline_mode = #tpu.pipeline_mode<synchronous>, transform_indices = @transform_4, window_bounds = array<i64: 1, 64>}, {pipeline_mode = #tpu.pipeline_mode<synchronous>, transform_indices = @transform_5, window_bounds = array<i64: 1, 64>}, {pipeline_mode = #tpu.pipeline_mode<synchronous>, transform_indices = @transform_6, window_bounds = array<i64: 1, 64>}, {pipeline_mode = #tpu.pipeline_mode<synchronous>, transform_indices = @transform_7, window_bounds = array<i64: 64, 128>}, {pipeline_mode = #tpu.pipeline_mode<synchronous>, transform_indices = @transform_8, window_bounds = array<i64: 1, 128>}, {transform_indices = @transform_9, window_bounds = array<i64: 16, 4>}]} {
    %c0 = arith.constant 0 : index
    %c0_0 = arith.constant 0 : index
    %0 = vector.load %arg1[%c0, %c0_0] : memref<16x32xf32, #tpu.memory_space<vmem>>, vector<16x32xf32>
    %1 = arith.truncf %0 : vector<16x32xf32> to vector<16x32xbf16>
    %c0_1 = arith.constant 0 : index
    %c0_2 = arith.constant 0 : index
    %2 = vector.load %arg2[%c0_1, %c0_2] : memref<32x128xbf16, #tpu.memory_space<vmem>>, vector<32x128xbf16>
    %cst = arith.constant dense<0.000000e+00> : vector<16x128xf32>
    %3 = tpu.matmul %1, %2, %cst {dimension_numbers = #tpu.dot_dimension_numbers<[1], [0], [0], [1], [0, 0, 1, 1], [], []>} : vector<16x32xbf16>, vector<32x128xbf16>, vector<16x128xf32> -> vector<16x128xf32>
    %c0_3 = arith.constant 0 : index
    %c0_4 = arith.constant 0 : index
    %4 = vector.load %arg3[%c0_3, %c0_4] : memref<1x128xf32, #tpu.memory_space<vmem>>, vector<1x128xf32>
    %5 = vector.broadcast %4 : vector<1x128xf32> to vector<16x128xf32>
    %6 = arith.addf %3, %5 : vector<16x128xf32>
    %cst_5 = arith.constant 5.000000e-01 : f32
    %7 = vector.broadcast %cst_5 : f32 to vector<16x128xf32>
    %8 = arith.mulf %7, %6 : vector<16x128xf32>
    %cst_6 = arith.constant 5.000000e-01 : f32
    %9 = vector.broadcast %cst_6 : f32 to vector<16x128xf32>
    %10 = arith.mulf %9, %6 : vector<16x128xf32>
    %11 = math.tanh %10 : vector<16x128xf32>
    %cst_7 = arith.constant 1.000000e+00 : f32
    %12 = vector.broadcast %cst_7 : f32 to vector<16x128xf32>
    %13 = arith.addf %12, %11 : vector<16x128xf32>
    %14 = arith.mulf %8, %13 : vector<16x128xf32>
    %15 = arith.truncf %14 : vector<16x128xf32> to vector<16x128xbf16>
    %c0_8 = arith.constant 0 : index
    %c0_9 = arith.constant 0 : index
    %16 = vector.load %arg4[%c0_8, %c0_9] : memref<128x64xbf16, #tpu.memory_space<vmem>>, vector<128x64xbf16>
    %cst_10 = arith.constant dense<0.000000e+00> : vector<16x64xf32>
    %17 = tpu.matmul %15, %16, %cst_10 {dimension_numbers = #tpu.dot_dimension_numbers<[1], [0], [0], [1], [0, 0, 1, 1], [], []>} : vector<16x128xbf16>, vector<128x64xbf16>, vector<16x64xf32> -> vector<16x64xf32>
    %c0_11 = arith.constant 0 : index
    %c0_12 = arith.constant 0 : index
    %18 = vector.load %arg5[%c0_11, %c0_12] : memref<1x64xf32, #tpu.memory_space<vmem>>, vector<1x64xf32>
    %19 = vector.broadcast %18 : vector<1x64xf32> to vector<16x64xf32>
    %20 = arith.addf %17, %19 : vector<16x64xf32>
    %cst_13 = arith.constant dense<0.000000e+00> : vector<16xf32>
    %21 = vector.multi_reduction <add>, %20, %cst_13 [1] : vector<16x64xf32> to vector<16xf32>
    %22 = vector.shape_cast %21 : vector<16xf32> to vector<16x1xf32>
    %23 = arith.mulf %20, %20 : vector<16x64xf32>
    %cst_14 = arith.constant dense<0.000000e+00> : vector<16xf32>
    %24 = vector.multi_reduction <add>, %23, %cst_14 [1] : vector<16x64xf32> to vector<16xf32>
    %25 = vector.shape_cast %24 : vector<16xf32> to vector<16x1xf32>
    %cst_15 = arith.constant 1.562500e-02 : f32
    %26 = vector.broadcast %cst_15 : f32 to vector<16x1xf32>
    %27 = arith.mulf %22, %26 : vector<16x1xf32>
    %cst_16 = arith.constant 1.562500e-02 : f32
    %28 = vector.broadcast %cst_16 : f32 to vector<16x1xf32>
    %29 = arith.mulf %25, %28 : vector<16x1xf32>
    %30 = arith.mulf %27, %27 : vector<16x1xf32>
    %31 = arith.subf %29, %30 : vector<16x1xf32>
    %cst_17 = arith.constant 0.000000e+00 : f32
    %32 = vector.broadcast %cst_17 : f32 to vector<16x1xf32>
    %33 = arith.maximumf %31, %32 : vector<16x1xf32>
    %34 = vector.broadcast %27 : vector<16x1xf32> to vector<16x64xf32>
    %35 = arith.subf %20, %34 : vector<16x64xf32>
    %cst_18 = arith.constant 9.99999974E-6 : f32
    %36 = vector.broadcast %cst_18 : f32 to vector<16x1xf32>
    %37 = arith.addf %33, %36 : vector<16x1xf32>
    %38 = math.rsqrt %37 : vector<16x1xf32>
    %39 = vector.broadcast %38 : vector<16x1xf32> to vector<16x64xf32>
    %40 = arith.mulf %35, %39 : vector<16x64xf32>
    %c0_19 = arith.constant 0 : index
    %c0_20 = arith.constant 0 : index
    %41 = vector.load %arg6[%c0_19, %c0_20] : memref<1x64xf32, #tpu.memory_space<vmem>>, vector<1x64xf32>
    %42 = vector.broadcast %41 : vector<1x64xf32> to vector<16x64xf32>
    %43 = arith.mulf %40, %42 : vector<16x64xf32>
    %c0_21 = arith.constant 0 : index
    %c0_22 = arith.constant 0 : index
    %44 = vector.load %arg7[%c0_21, %c0_22] : memref<1x64xf32, #tpu.memory_space<vmem>>, vector<1x64xf32>
    %45 = vector.broadcast %44 : vector<1x64xf32> to vector<16x64xf32>
    %46 = arith.addf %43, %45 : vector<16x64xf32>
    %cst_23 = arith.constant 5.000000e-01 : f32
    %47 = vector.broadcast %cst_23 : f32 to vector<16x64xf32>
    %48 = arith.mulf %47, %46 : vector<16x64xf32>
    %cst_24 = arith.constant 5.000000e-01 : f32
    %49 = vector.broadcast %cst_24 : f32 to vector<16x64xf32>
    %50 = arith.mulf %49, %46 : vector<16x64xf32>
    %51 = math.tanh %50 : vector<16x64xf32>
    %cst_25 = arith.constant 1.000000e+00 : f32
    %52 = vector.broadcast %cst_25 : f32 to vector<16x64xf32>
    %53 = arith.addf %52, %51 : vector<16x64xf32>
    %54 = arith.mulf %48, %53 : vector<16x64xf32>
    %55 = arith.truncf %54 : vector<16x64xf32> to vector<16x64xbf16>
    %c0_26 = arith.constant 0 : index
    %c0_27 = arith.constant 0 : index
    %56 = vector.load %arg8[%c0_26, %c0_27] : memref<64x128xbf16, #tpu.memory_space<vmem>>, vector<64x128xbf16>
    %cst_28 = arith.constant dense<0.000000e+00> : vector<16x128xf32>
    %57 = tpu.matmul %55, %56, %cst_28 {dimension_numbers = #tpu.dot_dimension_numbers<[1], [0], [0], [1], [0, 0, 1, 1], [], []>} : vector<16x64xbf16>, vector<64x128xbf16>, vector<16x128xf32> -> vector<16x128xf32>
    %c0_29 = arith.constant 0 : index
    %c0_30 = arith.constant 0 : index
    %58 = vector.load %arg9[%c0_29, %c0_30] : memref<1x128xf32, #tpu.memory_space<vmem>>, vector<1x128xf32>
    %59 = vector.broadcast %58 : vector<1x128xf32> to vector<16x128xf32>
    %60 = arith.addf %57, %59 : vector<16x128xf32>
    %61 = vector.extract_strided_slice %60 {offsets = [0, 0], sizes = [16, 4], strides = [1, 1]} : vector<16x128xf32> to vector<16x4xf32>
    %c0_31 = arith.constant 0 : index
    %c0_32 = arith.constant 0 : index
    %62 = vector.load %arg10[%c0_31, %c0_32] : memref<16x4xf32, #tpu.memory_space<vmem>>, vector<16x4xf32>
    tpu.vector_store %arg10[%c0_31, %c0_32], %61 {strides = array<i32>} : memref<16x4xf32, #tpu.memory_space<vmem>>, vector<16x4xf32>,
    return
  }
  func.func @transform_0(%arg0: i32) -> (i32, i32) {
    %c0_i32 = arith.constant 0 : i32
    %c0_i32_0 = arith.constant 0 : i32
    return %arg0, %c0_i32 : i32, i32
  }
  func.func @transform_1(%arg0: i32) -> (i32, i32) {
    %c0_i32 = arith.constant 0 : i32
    %c0_i32_0 = arith.constant 0 : i32
    %c0_i32_1 = arith.constant 0 : i32
    return %c0_i32, %c0_i32_0 : i32, i32
  }
  func.func @transform_2(%arg0: i32) -> (i32, i32) {
    %c0_i32 = arith.constant 0 : i32
    %c0_i32_0 = arith.constant 0 : i32
    %c0_i32_1 = arith.constant 0 : i32
    return %c0_i32, %c0_i32_0 : i32, i32
  }
  func.func @transform_3(%arg0: i32) -> (i32, i32) {
    %c0_i32 = arith.constant 0 : i32
    %c0_i32_0 = arith.constant 0 : i32
    %c0_i32_1 = arith.constant 0 : i32
    return %c0_i32, %c0_i32_0 : i32, i32
  }
  func.func @transform_4(%arg0: i32) -> (i32, i32) {
    %c0_i32 = arith.constant 0 : i32
    %c0_i32_0 = arith.constant 0 : i32
    %c0_i32_1 = arith.constant 0 : i32
    return %c0_i32, %c0_i32_0 : i32, i32
  }
  func.func @transform_5(%arg0: i32) -> (i32, i32) {
    %c0_i32 = arith.constant 0 : i32
    %c0_i32_0 = arith.constant 0 : i32
    %c0_i32_1 = arith.constant 0 : i32
    return %c0_i32, %c0_i32_0 : i32, i32
  }
  func.func @transform_6(%arg0: i32) -> (i32, i32) {
    %c0_i32 = arith.constant 0 : i32
    %c0_i32_0 = arith.constant 0 : i32
    %c0_i32_1 = arith.constant 0 : i32
    return %c0_i32, %c0_i32_0 : i32, i32
  }
  func.func @transform_7(%arg0: i32) -> (i32, i32) {
    %c0_i32 = arith.constant 0 : i32
    %c0_i32_0 = arith.constant 0 : i32
    %c0_i32_1 = arith.constant 0 : i32
    return %c0_i32, %c0_i32_0 : i32, i32
  }
  func.func @transform_8(%arg0: i32) -> (i32, i32) {
    %c0_i32 = arith.constant 0 : i32
    %c0_i32_0 = arith.constant 0 : i32
    %c0_i32_1 = arith.constant 0 : i32
    return %c0_i32, %c0_i32_0 : i32, i32
  }
  func.func @transform_9(%arg0: i32) -> (i32, i32) {
    %c0_i32 = arith.constant 0 : i32
    %c0_i32_0 = arith.constant 0 : i32
    return %arg0, %c0_i32 : i32, i32
  }
}

</mosaic_0001>

<llo_original>
// kernel: multiclass_model_forward.1
$region0: #{multiclass_model_forward.1}
  #allocation0 [shape = 'u32[]', space=smem, size = 0x4, offset = 0x4, fixed_abs, tag = 'smem constant byte address 0x4 - core index']
  #allocation1 [shape = 'u32[144,128]{1,0:T(1,128)}', space=vmem, size = 0x12000, scoped, tag = 'internal scratch']
  %s0 = inlined_call_operand.vmem [shape: f32[16,32], index: 0, kind: input, shape index: {}]
  %s1 = inlined_call_operand.vmem [shape: bf16[32,128], index: 1, kind: input, shape index: {}]
  %s2 = inlined_call_operand.vmem [shape: f32[1,128], index: 2, kind: input, shape index: {}]
  %s3 = inlined_call_operand.vmem [shape: bf16[128,64], index: 3, kind: input, shape index: {}]
  %s4 = inlined_call_operand.vmem [shape: f32[1,64], index: 4, kind: input, shape index: {}]
  %s5 = inlined_call_operand.vmem [shape: f32[1,64], index: 5, kind: input, shape index: {}]
  %s6 = inlined_call_operand.vmem [shape: f32[1,64], index: 6, kind: input, shape index: {}]
  %s7 = inlined_call_operand.vmem [shape: bf16[64,128], index: 7, kind: input, shape index: {}]
  %s8 = inlined_call_operand.vmem [shape: f32[1,128], index: 8, kind: input, shape index: {}]
  %s9 = inlined_call_operand.vmem [shape: f32[16,4], index: 9, kind: output, shape index: {}]
  %s10 = sld [smem:[#allocation0]]
  $region46: #{multiclass_model_forward.1} parent=0
    _
  %s12 = ssub.s32 1, %s10
  %s13 = scalar_select 0, %s12, %s10
  // Predicated region
  $region2: #{multiclass_model_forward.1} parent=0 // pred_check
    _
  $region3: #{multiclass_model_forward.1} parent=0 // pred_check_branch
    %15 = sbr.rel (0) target = $region5
  $region4: #{multiclass_model_forward.1} parent=0 // pred_region
    _
  $region5: #{multiclass_model_forward.1} parent=0 // pred_fallthru
    _
  // Predicated region
  $region6: #{multiclass_model_forward.1} parent=0 // pred_check
    _
  $region7: #{multiclass_model_forward.1} parent=0 // pred_check_branch
    %17 = sbr.rel (0) target = $region9
  $region8: #{multiclass_model_forward.1} parent=0 // pred_region
    _
  $region9: #{multiclass_model_forward.1} parent=0 // pred_fallthru
    _
  // Predicated region
  $region10: #{multiclass_model_forward.1} parent=0 // pred_check
    _
  $region11: #{multiclass_model_forward.1} parent=0 // pred_check_branch
    %19 = sbr.rel (0) target = $region13
  $region12: #{multiclass_model_forward.1} parent=0 // pred_region
    _
  $region13: #{multiclass_model_forward.1} parent=0 // pred_fallthru
    _
  // Predicated region
  $region14: #{multiclass_model_forward.1} parent=0 // pred_check
    _
  $region15: #{multiclass_model_forward.1} parent=0 // pred_check_branch
    %21 = sbr.rel (0) target = $region17
  $region16: #{multiclass_model_forward.1} parent=0 // pred_region
    _
  $region17: #{multiclass_model_forward.1} parent=0 // pred_fallthru
    _
  // Predicated region
  $region18: #{multiclass_model_forward.1} parent=0 // pred_check
    _
  $region19: #{multiclass_model_forward.1} parent=0 // pred_check_branch
    %23 = sbr.rel (0) target = $region21
  $region20: #{multiclass_model_forward.1} parent=0 // pred_region
    _
  $region21: #{multiclass_model_forward.1} parent=0 // pred_fallthru
    _
  // Predicated region
  $region22: #{multiclass_model_forward.1} parent=0 // pred_check
    _
  $region23: #{multiclass_model_forward.1} parent=0 // pred_check_branch
    %25 = sbr.rel (0) target = $region25
  $region24: #{multiclass_model_forward.1} parent=0 // pred_region
    _
  $region25: #{multiclass_model_forward.1} parent=0 // pred_fallthru
    _
  // Predicated region
  $region26: #{multiclass_model_forward.1} parent=0 // pred_check
    _
  $region27: #{multiclass_model_forward.1} parent=0 // pred_check_branch
    %27 = sbr.rel (0) target = $region29
  $region28: #{multiclass_model_forward.1} parent=0 // pred_region
    _
  $region29: #{multiclass_model_forward.1} parent=0 // pred_fallthru
    _
  // Predicated region
  $region30: #{multiclass_model_forward.1} parent=0 // pred_check
    _
  $region31: #{multiclass_model_forward.1} parent=0 // pred_check_branch
    %29 = sbr.rel (0) target = $region33
  $region32: #{multiclass_model_forward.1} parent=0 // pred_region
    _
  $region33: #{multiclass_model_forward.1} parent=0 // pred_fallthru
    _
  // Predicated region
  $region34: #{multiclass_model_forward.1} parent=0 // pred_check
    _
  $region35: #{multiclass_model_forward.1} parent=0 // pred_check_branch
    %31 = sbr.rel (0) target = $region37
  $region36: #{multiclass_model_forward.1} parent=0 // pred_region
    _
  $region37: #{multiclass_model_forward.1} parent=0 // pred_fallthru
    _
  %v33 = vld [vmem:[%s0] sm:$0xff]
  %v34 = vld [vmem:[%s0 + $0x8] sm:$0xff]
  %v35 = vpack.c.bf16 %v34, %v33
  %v36 = vld [vmem:[%s1] sm:$0xf]
  %v37 = vld [vmem:[%s1 + $0x4] sm:$0xf]
  %v38 = vld [vmem:[%s1 + $0x8] sm:$0xf]
  %v39 = vld [vmem:[%s1 + $0xc] sm:$0xf]
  %v40 = vld [vmem:[%s2] sm:$0x1]
  %v42 = vlaneseq
  %v43 = vshrl.u32 %v42, 7
  %v44 = vsub.s32 0, %v43
  %v45 = vrot.slane %v40, %v44
  %v51 = vunpack.c.l.b16 %v36
  %v52 = vunpack.c.l.b16 %v37
  %v53 = vunpack.c.l.b16 %v38
  %v54 = vunpack.c.l.b16 %v39
  %v55 = vpack.c.b16 %v52, %v51
  %v56 = vpack.c.b16 %v54, %v53
  %vm59 = vcmask 261120
  %v61 = vsel %vm59, %v35, 0
  %63 = vmatprep.subr.bf16.mxu0 0
  %64 = vmatpush1.bf16.msra.mxu0 0
  %65 = vmatprep.subr.bf16.mxu0 0
  %66 = vmatpush1.bf16.msra.mxu0 0
  %67 = vmatprep.subr.bf16.mxu0 0
  %68 = vmatpush1.bf16.msra.mxu0 0
  %69 = vmatprep.subr.bf16.mxu0 0
  %70 = vmatpush1.bf16.msra.mxu0 0
  %71 = vmatprep.subr.bf16.mxu0 0
  %72 = vmatpush1.bf16.msra.mxu0 0
  %73 = vmatprep.subr.bf16.mxu0 0
  %74 = vmatpush1.bf16.msra.mxu0 0
  %75 = vmatprep.subr.bf16.mxu0 0
  %76 = vmatpush1.bf16.msra.mxu0 %v56
  %77 = vmatprep.subr.bf16.mxu0 0
  %78 = vmatpush1.bf16.msra.mxu0 %v55
  %79 = vmatprep.subr.bf16.mxu0 0
  %80 = vmatpush2.bf16.msra.mxu0 0
  %81 = vmatprep.subr.bf16.mxu0 0
  %82 = vmatpush2.bf16.msra.mxu0 0
  %83 = vmatprep.subr.bf16.mxu0 0
  %84 = vmatpush2.bf16.msra.mxu0 0
  %85 = vmatprep.subr.bf16.mxu0 0
  %86 = vmatpush2.bf16.msra.mxu0 0
  %87 = vmatprep.subr.bf16.mxu0 0
  %88 = vmatpush2.bf16.msra.mxu0 0
  %89 = vmatprep.subr.bf16.mxu0 0
  %90 = vmatpush2.bf16.msra.mxu0 0
  %91 = vmatprep.subr.bf16.mxu0 0
  %92 = vmatpush2.bf16.msra.mxu0 0
  %93 = vmatprep.subr.bf16.mxu0 0
  %94 = vmatpush2.bf16.msra.mxu0 0
  %95 = vmatprep.mubr.bf16.mxu0 0
  %96 = vmatmul.mubr.bf16.gmra.mxu0 %v61
  %v97 = vpop.f32.mrf.mxu0
  %v98 = vadd.f32 %v45, %v97
  %v99 = vpop.f32.mrf.mxu0
  %v100 = vpop.f32.mrf.mxu0
  %v101 = vadd.f32 %v45, %v100
  %v102 = vpop.f32.mrf.mxu0
  %103 = vdwg.mxu0
  %v104 = vmul.f32 %v98, 0.5
  %v105 = vmul.f32 %v101, 0.5
  %v106 = vtanh.pop %v104
  %v107 = vtanh.pop %v105
  %v108 = vadd.f32 %v106, 1.0
  %v109 = vadd.f32 %v107, 1.0
  %v110 = vmul.f32 %v104, %v108
  %v111 = vmul.f32 %v105, %v109
  %v112 = vpack.c.bf16 %v111, %v110
  %v113 = vld [vmem:[%s3] sm:$0xf]
  %v114 = vld [vmem:[%s3 + $0x4] sm:$0xf]
  %v115 = vld [vmem:[%s3 + $0x8] sm:$0xf]
  %v116 = vld [vmem:[%s3 + $0xc] sm:$0xf]
  %v117 = vld [vmem:[%s3 + $0x10] sm:$0xf]
  %v118 = vld [vmem:[%s3 + $0x14] sm:$0xf]
  %v119 = vld [vmem:[%s3 + $0x18] sm:$0xf]
  %v120 = vld [vmem:[%s3 + $0x1c] sm:$0xf]
  %v121 = vld [vmem:[%s3 + $0x20] sm:$0xf]
  %v122 = vld [vmem:[%s3 + $0x24] sm:$0xf]
  %v123 = vld [vmem:[%s3 + $0x28] sm:$0xf]
  %v124 = vld [vmem:[%s3 + $0x2c] sm:$0xf]
  %v125 = vld [vmem:[%s3 + $0x30] sm:$0xf]
  %v126 = vld [vmem:[%s3 + $0x34] sm:$0xf]
  %v127 = vld [vmem:[%s3 + $0x38] sm:$0xf]
  %v128 = vld [vmem:[%s3 + $0x3c] sm:$0xf]
  %v129 = vld [vmem:[%s4] sm:$0x1]
  %v131 = vlaneseq
  %v132 = vshrl.u32 %v131, 7
  %v133 = vsub.s32 0, %v132
  %v134 = vrot.slane %v129, %v133
  %v152 = vunpack.c.l.b16 %v113
  %v153 = vunpack.c.l.b16 %v114
  %v154 = vunpack.c.l.b16 %v115
  %v155 = vunpack.c.l.b16 %v116
  %v156 = vunpack.c.l.b16 %v117
  %v157 = vunpack.c.l.b16 %v118
  %v158 = vunpack.c.l.b16 %v119
  %v159 = vunpack.c.l.b16 %v120
  %v160 = vunpack.c.l.b16 %v121
  %v161 = vunpack.c.l.b16 %v122
  %v162 = vunpack.c.l.b16 %v123
  %v163 = vunpack.c.l.b16 %v124
  %v164 = vunpack.c.l.b16 %v125
  %v165 = vunpack.c.l.b16 %v126
  %v166 = vunpack.c.l.b16 %v127
  %v167 = vunpack.c.l.b16 %v128
  %v168 = vpack.c.b16 %v153, %v152
  %v169 = vpack.c.b16 %v155, %v154
  %v170 = vpack.c.b16 %v157, %v156
  %v171 = vpack.c.b16 %v159, %v158
  %v172 = vpack.c.b16 %v161, %v160
  %v173 = vpack.c.b16 %v163, %v162
  %v174 = vpack.c.b16 %v165, %v164
  %v175 = vpack.c.b16 %v167, %v166
  %184 = vmatprep.subr.bf16.mxu0 0
  %185 = vmatpush1.bf16.msra.mxu0 %v175
  %186 = vmatprep.subr.bf16.mxu0 0
  %187 = vmatpush1.bf16.msra.mxu0 %v174
  %188 = vmatprep.subr.bf16.mxu0 0
  %189 = vmatpush1.bf16.msra.mxu0 %v173
  %190 = vmatprep.subr.bf16.mxu0 0
  %191 = vmatpush1.bf16.msra.mxu0 %v172
  %192 = vmatprep.subr.bf16.mxu0 0
  %193 = vmatpush1.bf16.msra.mxu0 %v171
  %194 = vmatprep.subr.bf16.mxu0 0
  %195 = vmatpush1.bf16.msra.mxu0 %v170
  %196 = vmatprep.subr.bf16.mxu0 0
  %197 = vmatpush1.bf16.msra.mxu0 %v169
  %198 = vmatprep.subr.bf16.mxu0 0
  %199 = vmatpush1.bf16.msra.mxu0 %v168
  %200 = vmatprep.subr.bf16.mxu0 0
  %201 = vmatpush2.bf16.msra.mxu0 0
  %202 = vmatprep.subr.bf16.mxu0 0
  %203 = vmatpush2.bf16.msra.mxu0 0
  %204 = vmatprep.subr.bf16.mxu0 0
  %205 = vmatpush2.bf16.msra.mxu0 0
  %206 = vmatprep.subr.bf16.mxu0 0
  %207 = vmatpush2.bf16.msra.mxu0 0
  %208 = vmatprep.subr.bf16.mxu0 0
  %209 = vmatpush2.bf16.msra.mxu0 0
  %210 = vmatprep.subr.bf16.mxu0 0
  %211 = vmatpush2.bf16.msra.mxu0 0
  %212 = vmatprep.subr.bf16.mxu0 0
  %213 = vmatpush2.bf16.msra.mxu0 0
  %214 = vmatprep.subr.bf16.mxu0 0
  %215 = vmatpush2.bf16.msra.mxu0 0
  %216 = vmatprep.mubr.bf16.mxu0 0
  %217 = vmatmul.mubr.bf16.gmra.mxu0 %v112
  %v218 = vpop.f32.mrf.mxu0
  %v219 = vadd.f32 %v134, %v218
  %v220 = vpop.f32.mrf.mxu0
  %v221 = vpop.f32.mrf.mxu0
  %v222 = vadd.f32 %v134, %v221
  %v223 = vpop.f32.mrf.mxu0
  %224 = vdwg.mxu0
  %vm225 = vcmask 523264
  %v226 = vsel %vm225, %v219, 0.0
  %227 = vadd.xlane.f32.xlu0 %v226
  %v228 = vpop.xlane.xlu0 %227
  %v229 = vsel %vm225, %v222, 0.0
  %230 = vadd.xlane.f32.xlu0 %v229
  %v231 = vpop.xlane.xlu0 %230
  %v232 = vmul.f32 %v219, %v219
  %v233 = vmul.f32 %v222, %v222
  %v234 = vsel %vm225, %v232, 0.0
  %235 = vadd.xlane.f32.xlu0 %v234
  %v236 = vpop.xlane.xlu0 %235
  %v237 = vsel %vm225, %v233, 0.0
  %238 = vadd.xlane.f32.xlu0 %v237
  %v239 = vpop.xlane.xlu0 %238
  %v240 = vmul.f32 %v228, 0.015625
  %v241 = vmul.f32 %v231, 0.015625
  %v242 = vmul.f32 %v236, 0.015625
  %v243 = vmul.f32 %v239, 0.015625
  %v244 = vmul.f32 %v240, %v240
  %v245 = vmul.f32 %v241, %v241
  %v246 = vsub.f32 %v242, %v244
  %v247 = vsub.f32 %v243, %v245
  %v248 = vmax.f32 %v246, 0.0
  %v249 = vmax.f32 %v247, 0.0
  %v250 = vsub.f32 %v219, %v240
  %v251 = vsub.f32 %v222, %v241
  %v252 = vadd.f32 %v248, 1e-05
  %v253 = vadd.f32 %v249, 1e-05
  %v254 = vrsqrt.pop %v252
  %v255 = vrsqrt.pop %v253
  %v256 = vmul.f32 %v250, %v254
  %v257 = vmul.f32 %v251, %v255
  %v258 = vld [vmem:[%s5] sm:$0x1]
  %v260 = vlaneseq
  %v261 = vshrl.u32 %v260, 7
  %v262 = vsub.s32 0, %v261
  %v263 = vrot.slane %v258, %v262
  %v265 = vmul.f32 %v256, %v263
  %v266 = vmul.f32 %v257, %v263
  %v267 = vld [vmem:[%s6] sm:$0x1]
  %v269 = vlaneseq
  %v270 = vshrl.u32 %v269, 7
  %v271 = vsub.s32 0, %v270
  %v272 = vrot.slane %v267, %v271
  %v274 = vadd.f32 %v265, %v272
  %v275 = vadd.f32 %v266, %v272
  %v276 = vmul.f32 %v274, 0.5
  %v277 = vmul.f32 %v275, 0.5
  %v278 = vtanh.pop %v276
  %v279 = vtanh.pop %v277
  %v280 = vadd.f32 %v278, 1.0
  %v281 = vadd.f32 %v279, 1.0
  %v282 = vmul.f32 %v276, %v280
  %v283 = vmul.f32 %v277, %v281
  %v284 = vpack.c.bf16 %v283, %v282
  %v285 = vld [vmem:[%s7] sm:$0xf]
  %v286 = vld [vmem:[%s7 + $0x4] sm:$0xf]
  %v287 = vld [vmem:[%s7 + $0x8] sm:$0xf]
  %v288 = vld [vmem:[%s7 + $0xc] sm:$0xf]
  %v289 = vld [vmem:[%s7 + $0x10] sm:$0xf]
  %v290 = vld [vmem:[%s7 + $0x14] sm:$0xf]
  %v291 = vld [vmem:[%s7 + $0x18] sm:$0xf]
  %v292 = vld [vmem:[%s7 + $0x1c] sm:$0xf]
  %v293 = vld [vmem:[%s8] sm:$0x1]
  %v295 = vlaneseq
  %v296 = vshrl.u32 %v295, 7
  %v297 = vsub.s32 0, %v296
  %v298 = vrot.slane %v293, %v297
  %v308 = vunpack.c.l.b16 %v285
  %v309 = vunpack.c.l.b16 %v286
  %v310 = vunpack.c.l.b16 %v287
  %v311 = vunpack.c.l.b16 %v288
  %v312 = vunpack.c.l.b16 %v289
  %v313 = vunpack.c.l.b16 %v290
  %v314 = vunpack.c.l.b16 %v291
  %v315 = vunpack.c.l.b16 %v292
  %v316 = vpack.c.b16 %v309, %v308
  %v317 = vpack.c.b16 %v311, %v310
  %v318 = vpack.c.b16 %v313, %v312
  %v319 = vpack.c.b16 %v315, %v314
  %v325 = vsel %vm225, %v284, 0
  %327 = vmatprep.subr.bf16.mxu0 0
  %328 = vmatpush1.bf16.msra.mxu0 0
  %329 = vmatprep.subr.bf16.mxu0 0
  %330 = vmatpush1.bf16.msra.mxu0 0
  %331 = vmatprep.subr.bf16.mxu0 0
  %332 = vmatpush1.bf16.msra.mxu0 0
  %333 = vmatprep.subr.bf16.mxu0 0
  %334 = vmatpush1.bf16.msra.mxu0 0
  %335 = vmatprep.subr.bf16.mxu0 0
  %336 = vmatpush1.bf16.msra.mxu0 %v319
  %337 = vmatprep.subr.bf16.mxu0 0
  %338 = vmatpush1.bf16.msra.mxu0 %v318
  %339 = vmatprep.subr.bf16.mxu0 0
  %340 = vmatpush1.bf16.msra.mxu0 %v317
  %341 = vmatprep.subr.bf16.mxu0 0
  %342 = vmatpush1.bf16.msra.mxu0 %v316
  %343 = vmatprep.subr.bf16.mxu0 0
  %344 = vmatpush2.bf16.msra.mxu0 0
  %345 = vmatprep.subr.bf16.mxu0 0
  %346 = vmatpush2.bf16.msra.mxu0 0
  %347 = vmatprep.subr.bf16.mxu0 0
  %348 = vmatpush2.bf16.msra.mxu0 0
  %349 = vmatprep.subr.bf16.mxu0 0
  %350 = vmatpush2.bf16.msra.mxu0 0
  %351 = vmatprep.subr.bf16.mxu0 0
  %352 = vmatpush2.bf16.msra.mxu0 0
  %353 = vmatprep.subr.bf16.mxu0 0
  %354 = vmatpush2.bf16.msra.mxu0 0
  %355 = vmatprep.subr.bf16.mxu0 0
  %356 = vmatpush2.bf16.msra.mxu0 0
  %357 = vmatprep.subr.bf16.mxu0 0
  %358 = vmatpush2.bf16.msra.mxu0 0
  %359 = vmatprep.mubr.bf16.mxu0 0
  %360 = vmatmul.mubr.bf16.gmra.mxu0 %v325
  %v361 = vpop.f32.mrf.mxu0
  %v362 = vadd.f32 %v298, %v361
  %v363 = vpop.f32.mrf.mxu0
  %v364 = vpop.f32.mrf.mxu0
  %v365 = vadd.f32 %v298, %v364
  %v366 = vpop.f32.mrf.mxu0
  %367 = vdwg.mxu0
  %vm368 = vcmask 31744
  %369 = vst.msk [vmem:[%s9] sm:$0xff] %vm368, %v362
  %370 = vst.msk [vmem:[%s9 + $0x8] sm:$0xff] %vm368, %v365
  // Predicated region
  $region38: #{multiclass_model_forward.1} parent=0 // pred_check
    _
  $region39: #{multiclass_model_forward.1} parent=0 // pred_check_branch
    %372 = sbr.rel (0) target = $region41
  $region40: #{multiclass_model_forward.1} parent=0 // pred_region
    _
  $region41: #{multiclass_model_forward.1} parent=0 // pred_fallthru
    _
  // Predicated region
  $region42: #{multiclass_model_forward.1} parent=0 // pred_check
    _
  $region43: #{multiclass_model_forward.1} parent=0 // pred_check_branch
    %374 = sbr.rel (0) target = $region45
  $region44: #{multiclass_model_forward.1} parent=0 // pred_region
    _
  $region45: #{multiclass_model_forward.1} parent=0 // pred_fallthru
    _

</llo_original>
